<compile_context>
chip_gen: v7x
topology: tpu7x:2x2x1
jax: 0.10.0
libtpu: 0.0.40
codegen_flags: <defaults>
</compile_context>

<pallas_src>
import functools

import jax
import jax.numpy as jnp
from jax.experimental import pallas as pl
from jax.experimental.pallas import tpu as pltpu


def mlp_kernel(x_ref, w1_ref, b1_ref, w2_ref, b2_ref, out_ref):
    """Fused (x @ W1 + b1) -> ReLU -> (@ W2 + b2) for one batch tile."""
    # Layer 1 on the MXU: bf16 x bf16 -> f32 accumulate.
    h = jnp.dot(x_ref[...], w1_ref[...], preferred_element_type=jnp.float32)
    # Bias add + ReLU in f32 on the VPU (avoid bf16 elementwise on v5e).
    h = jnp.maximum(h + b1_ref[...], 0.0)
    # Layer 2 (tiny, VMEM-resident f32 weights), f32 MXU path.
    y = jnp.dot(h, w2_ref[...], preferred_element_type=jnp.float32)
    out_ref[...] = (y + b2_ref[...]).astype(out_ref.dtype)


def _round_up(n, m):
    return ((n + m - 1) // m) * m


@functools.partial(jax.jit, static_argnames=("tile_b",))
def net_forward(x, w1, b1, w2, b2, *, tile_b=512):
    """y = relu(x @ W1 + b1) @ W2 + b2, batched over the leading dim of x."""
    B, obs = x.shape
    H = w1.shape[1]
    A = w2.shape[1]
    A_PAD = 128  # lane-dense output width (multiple of 128)

    # --- one-time wrapper-side layout / dtype plumbing (not per grid step) ---
    # bf16 streaming operands (the x stream dominates HBM traffic at large B).
    x_bf = x.astype(jnp.bfloat16)
    w1_bf = w1.astype(jnp.bfloat16)
    # Zero-pad the second layer to 128 output lanes -> unmasked stores.
    w2_p = jnp.zeros((H, A_PAD), jnp.float32).at[:, :A].set(w2.astype(jnp.float32))
    b2_p = jnp.zeros((1, A_PAD), jnp.float32).at[:, :A].set(b2.astype(jnp.float32))
    b1_f = b1.astype(jnp.float32)

    # Batch tiling: biggest tile we asked for, but never larger than the
    # (8-rounded) batch itself; pad rows so the grid divides evenly.
    tb = min(tile_b, _round_up(B, 8))
    tb = _round_up(tb, 8)
    B_pad = _round_up(B, tb)
    if B_pad != B:
        x_bf = jnp.pad(x_bf, ((0, B_pad - B), (0, 0)))
    grid = (B_pad // tb,)

    cost = pl.CostEstimate(
        flops=2 * B_pad * (obs * H + H * A_PAD),
        transcendentals=0,
        bytes_accessed=(x_bf.size * 2 + w1_bf.size * 2
                        + (b1_f.size + w2_p.size + b2_p.size) * 4
                        + B_pad * A_PAD * 4),
    )

    out = pl.pallas_call(
        mlp_kernel,
        out_shape=jax.ShapeDtypeStruct((B_pad, A_PAD), jnp.float32),
        grid=grid,
        in_specs=[
            pl.BlockSpec((tb, obs), lambda i: (i, 0)),      # x: streamed per tile
            pl.BlockSpec((obs, H), lambda i: (0, 0)),       # W1: VMEM-resident
            pl.BlockSpec((1, H), lambda i: (0, 0)),         # b1: VMEM-resident
            pl.BlockSpec((H, A_PAD), lambda i: (0, 0)),     # W2 (padded): resident
            pl.BlockSpec((1, A_PAD), lambda i: (0, 0)),     # b2 (padded): resident
        ],
        out_specs=pl.BlockSpec((tb, A_PAD), lambda i: (i, 0)),
        compiler_params=pltpu.CompilerParams(
            dimension_semantics=("parallel",),      # v7x: split tiles across TCs
            vmem_limit_bytes=48 * 1024 * 1024,      # safe cap for v7x's 64 MiB
        ),
        cost_estimate=cost,
    )(x_bf, w1_bf, b1_f, w2_p, b2_p)

    # Undo wrapper-side padding (cheap XLA slice, outside the kernel).
    return out[:B, :A]


def init_params(key, obs_size, hidden_size, n_actions):
    """Deterministic init mimicking nn.Linear's uniform(-1/sqrt(fan_in), ...)."""
    k1, k2, k3, k4 = jax.random.split(key, 4)
    lim1 = 1.0 / jnp.sqrt(obs_size)
    lim2 = 1.0 / jnp.sqrt(hidden_size)
    w1 = jax.random.uniform(k1, (obs_size, hidden_size), jnp.float32, -lim1, lim1)
    b1 = jax.random.uniform(k2, (1, hidden_size), jnp.float32, -lim1, lim1)
    w2 = jax.random.uniform(k3, (hidden_size, n_actions), jnp.float32, -lim2, lim2)
    b2 = jax.random.uniform(k4, (1, n_actions), jnp.float32, -lim2, lim2)
    return w1, b1, w2, b2


if __name__ == "__main__":
    # Cartpole-ish feature sizes (obs=4, hidden=32, actions=2); batch = the
    # whole CEM population of transitions evaluated in ONE pallas_call so the
    # kernel actually exercises the batch grid (1024 rows -> 2 tiles of 512).
    batch, obs_size, hidden_size, n_actions = 1024, 4, 32, 2

    key = jax.random.PRNGKey(0)
    kx, kp = jax.random.split(key)
    x = jax.random.normal(kx, (batch, obs_size), jnp.float32)
    w1, b1, w2, b2 = init_params(kp, obs_size, hidden_size, n_actions)

    out = net_forward(x, w1, b1, w2, b2)
    out = jax.block_until_ready(out)

    # Pure-JAX reference using the same bf16 rounding the kernel sees.
    x_r = x.astype(jnp.bfloat16).astype(jnp.float32)
    w1_r = w1.astype(jnp.bfloat16).astype(jnp.float32)
    ref = jnp.maximum(x_r @ w1_r + b1, 0.0) @ w2 + b2

    assert out.shape == (batch, n_actions)
    assert jnp.allclose(out, ref, atol=1e-3, rtol=1e-3), (
        float(jnp.max(jnp.abs(out - ref))))

    print("KERNEL_OK")
</pallas_src>

<mosaic_0001>
module attributes {stable_mosaic.version = 11 : i64} {
  func.func @mlp_kernel(%arg0: i32, %arg1: memref<512x4xbf16, #tpu.memory_space<vmem>>, %arg2: memref<4x32xbf16, #tpu.memory_space<vmem>>, %arg3: memref<1x32xf32, #tpu.memory_space<vmem>>, %arg4: memref<32x128xf32, #tpu.memory_space<vmem>>, %arg5: memref<1x128xf32, #tpu.memory_space<vmem>>, %arg6: memref<512x128xf32, #tpu.memory_space<vmem>>) attributes {dimension_semantics = [#tpu.dimension_semantics<parallel>], iteration_bounds = array<i64: 2>, scalar_prefetch = 0 : i64, scratch_operands = 0 : i64, tpu.core_type = #tpu.core_type<tc>, window_params = [{transform_indices = @transform_0, window_bounds = array<i64: 512, 4>}, {pipeline_mode = #tpu.pipeline_mode<synchronous>, transform_indices = @transform_1, window_bounds = array<i64: 4, 32>}, {pipeline_mode = #tpu.pipeline_mode<synchronous>, transform_indices = @transform_2, window_bounds = array<i64: 1, 32>}, {pipeline_mode = #tpu.pipeline_mode<synchronous>, transform_indices = @transform_3, window_bounds = array<i64: 32, 128>}, {pipeline_mode = #tpu.pipeline_mode<synchronous>, transform_indices = @transform_4, window_bounds = array<i64: 1, 128>}, {transform_indices = @transform_5, window_bounds = array<i64: 512, 128>}]} {
    %c0 = arith.constant 0 : index
    %c0_0 = arith.constant 0 : index
    %0 = vector.load %arg1[%c0, %c0_0] : memref<512x4xbf16, #tpu.memory_space<vmem>>, vector<512x4xbf16>
    %c0_1 = arith.constant 0 : index
    %c0_2 = arith.constant 0 : index
    %1 = vector.load %arg2[%c0_1, %c0_2] : memref<4x32xbf16, #tpu.memory_space<vmem>>, vector<4x32xbf16>
    %cst = arith.constant dense<0.000000e+00> : vector<512x32xf32>
    %2 = tpu.matmul %0, %1, %cst {dimension_numbers = #tpu.dot_dimension_numbers<[1], [0], [0], [1], [0, 0, 1, 1], [], []>} : vector<512x4xbf16>, vector<4x32xbf16>, vector<512x32xf32> -> vector<512x32xf32>
    %c0_3 = arith.constant 0 : index
    %c0_4 = arith.constant 0 : index
    %3 = vector.load %arg3[%c0_3, %c0_4] : memref<1x32xf32, #tpu.memory_space<vmem>>, vector<1x32xf32>
    %4 = vector.broadcast %3 : vector<1x32xf32> to vector<512x32xf32>
    %5 = arith.addf %2, %4 : vector<512x32xf32>
    %cst_5 = arith.constant 0.000000e+00 : f32
    %6 = vector.broadcast %cst_5 : f32 to vector<512x32xf32>
    %7 = arith.maximumf %5, %6 : vector<512x32xf32>
    %c0_6 = arith.constant 0 : index
    %c0_7 = arith.constant 0 : index
    %8 = vector.load %arg4[%c0_6, %c0_7] : memref<32x128xf32, #tpu.memory_space<vmem>>, vector<32x128xf32>
    %cst_8 = arith.constant dense<0.000000e+00> : vector<512x128xf32>
    %9 = tpu.matmul %7, %8, %cst_8 {dimension_numbers = #tpu.dot_dimension_numbers<[1], [0], [0], [1], [0, 0, 1, 1], [], []>} : vector<512x32xf32>, vector<32x128xf32>, vector<512x128xf32> -> vector<512x128xf32>
    %c0_9 = arith.constant 0 : index
    %c0_10 = arith.constant 0 : index
    %10 = vector.load %arg5[%c0_9, %c0_10] : memref<1x128xf32, #tpu.memory_space<vmem>>, vector<1x128xf32>
    %11 = vector.broadcast %10 : vector<1x128xf32> to vector<512x128xf32>
    %12 = arith.addf %9, %11 : vector<512x128xf32>
    %c0_11 = arith.constant 0 : index
    %c0_12 = arith.constant 0 : index
    %13 = vector.load %arg6[%c0_11, %c0_12] : memref<512x128xf32, #tpu.memory_space<vmem>>, vector<512x128xf32>
    tpu.vector_store %arg6[%c0_11, %c0_12], %12 {strides = array<i32>} : memref<512x128xf32, #tpu.memory_space<vmem>>, vector<512x128xf32>,
    return
  }
  func.func @transform_0(%arg0: i32) -> (i32, i32) {
    %c0_i32 = arith.constant 0 : i32
    %c0_i32_0 = arith.constant 0 : i32
    return %arg0, %c0_i32 : i32, i32
  }
  func.func @transform_1(%arg0: i32) -> (i32, i32) {
    %c0_i32 = arith.constant 0 : i32
    %c0_i32_0 = arith.constant 0 : i32
    %c0_i32_1 = arith.constant 0 : i32
    return %c0_i32, %c0_i32_0 : i32, i32
  }
  func.func @transform_2(%arg0: i32) -> (i32, i32) {
    %c0_i32 = arith.constant 0 : i32
    %c0_i32_0 = arith.constant 0 : i32
    %c0_i32_1 = arith.constant 0 : i32
    return %c0_i32, %c0_i32_0 : i32, i32
  }
  func.func @transform_3(%arg0: i32) -> (i32, i32) {
    %c0_i32 = arith.constant 0 : i32
    %c0_i32_0 = arith.constant 0 : i32
    %c0_i32_1 = arith.constant 0 : i32
    return %c0_i32, %c0_i32_0 : i32, i32
  }
  func.func @transform_4(%arg0: i32) -> (i32, i32) {
    %c0_i32 = arith.constant 0 : i32
    %c0_i32_0 = arith.constant 0 : i32
    %c0_i32_1 = arith.constant 0 : i32
    return %c0_i32, %c0_i32_0 : i32, i32
  }
  func.func @transform_5(%arg0: i32) -> (i32, i32) {
    %c0_i32 = arith.constant 0 : i32
    %c0_i32_0 = arith.constant 0 : i32
    return %arg0, %c0_i32 : i32, i32
  }
}

</mosaic_0001>

<llo_original>
// kernel: net_forward.1
$region0: #{net_forward.1}
  #allocation0 [shape = 'u32[]', space=smem, size = 0x4, offset = 0x4, fixed_abs, tag = 'smem constant byte address 0x4 - core index']
  #allocation1 [shape = 'u32[144,128]{1,0:T(1,128)}', space=vmem, size = 0x12000, scoped, tag = 'internal scratch']
  %s0 = inlined_call_operand.vmem [shape: bf16[1024,4], index: 0, kind: input, shape index: {}]
  %s1 = inlined_call_operand.vmem [shape: bf16[4,32], index: 1, kind: input, shape index: {}]
  %s2 = inlined_call_operand.vmem [shape: f32[1,32], index: 2, kind: input, shape index: {}]
  %s3 = inlined_call_operand.vmem [shape: f32[32,128], index: 3, kind: input, shape index: {}]
  %s4 = inlined_call_operand.vmem [shape: f32[1,128], index: 4, kind: input, shape index: {}]
  %s5 = inlined_call_operand.vmem [shape: f32[1024,128], index: 5, kind: output, shape index: {}]
  %s6 = sld [smem:[#allocation0]]
  $region53: #{net_forward.1} parent=0
    _
  %s8 = ssub.s32 1, %s6
  %s9 = scalar_select 0, %s8, %s6
  loop: start=0, step=1, limit=4
  $region2: #{net_forward.1} parent=0 // loop_pre_header
    _
  $region3: #{net_forward.1} parent=0 // loop_header
    %s11 = sphi 0, %s15
    %p12 = scmp.ge.s32.totalorder %s11, 4
    %s21 = sphi 0, %s23
    %s24 = sphi 0, %s21
    %s25 = sphi 0, %s24
    %s41 = sphi 0, %s25
    %s45 = sphi 0, %s45
    %s47 = sphi 0, %s45
    %s48 = sphi 0, %s47
    %s62 = sphi 0, %s48
    %s66 = sphi 0, %s66
    %s68 = sphi 0, %s66
    %s69 = sphi 0, %s68
    %s83 = sphi 0, %s69
    %s87 = sphi 0, %s87
    %s89 = sphi 0, %s87
    %s90 = sphi 0, %s89
    %s104 = sphi 0, %s90
    %s108 = sphi 0, %s108
    %s110 = sphi 0, %s108
    %s111 = sphi 0, %s110
    %s125 = sphi 0, %s111
    %s131 = sphi 0, %s133
    %s134 = sphi 0, %s131
    %s135 = sphi 0, %s134
    %s151 = sphi 0, %s135
  $region4: #{net_forward.1} parent=0 // loop_header_branch
    %14 = sbr.rel (%p12) target = $region8
  $region5: #{net_forward.1} parent=0 // loop_body
    %s16 = ssub.s32 %s11, 1
    %s17 = ssub.s32 %s11, 2
    %s18 = sadd.s32 %s11, 1
    %s19 = ssub.s32 %s11, %s18
    %p20 = scmp.eq.s32.totalorder %s19, 0
    %s22 = sadd.s32 %s21, 1
    %s23 = scalar_select %p20, %s21, %s22
    %p26 = pneg %p20
    %p27 = scmp.eq.s32.totalorder %s11, 1
    %p28 = por %p26, %p27
    %p29 = scmp.ne.s32.totalorder %s21, %s24
    %p30 = scmp.eq.s32.totalorder %s11, 0
    %p31 = por %p29, %p30
    %p32 = scmp.ne.s32.totalorder %s21, %s24
    %p33 = scmp.eq.s32.totalorder %s16, 1
    %p34 = por %p32, %p33
    %p35 = scmp.ne.s32.totalorder %s24, %s25
    %p36 = scmp.eq.s32.totalorder %s16, 0
    %p37 = por %p35, %p36
    %p38 = scmp.ne.s32.totalorder %s24, %s25
    %p39 = scmp.eq.s32.totalorder %s17, 1
    %p40 = por %p38, %p39
    %p42 = scmp.ne.s32.totalorder %s25, %s41
    %p43 = scmp.eq.s32.totalorder %s17, 0
    %p44 = por %p42, %p43
    %s46 = sadd.s32 %s45, 1
    %p49 = scmp.eq.s32.totalorder %s11, 1
    %p50 = scmp.ne.s32.totalorder %s45, %s47
    %p51 = scmp.eq.s32.totalorder %s11, 0
    %p52 = por %p50, %p51
    %p53 = scmp.ne.s32.totalorder %s45, %s47
    %p54 = scmp.eq.s32.totalorder %s16, 1
    %p55 = por %p53, %p54
    %p56 = scmp.ne.s32.totalorder %s47, %s48
    %p57 = scmp.eq.s32.totalorder %s16, 0
    %p58 = por %p56, %p57
    %p59 = scmp.ne.s32.totalorder %s47, %s48
    %p60 = scmp.eq.s32.totalorder %s17, 1
    %p61 = por %p59, %p60
    %p63 = scmp.ne.s32.totalorder %s48, %s62
    %p64 = scmp.eq.s32.totalorder %s17, 0
    %p65 = por %p63, %p64
    %s67 = sadd.s32 %s66, 1
    %p70 = scmp.eq.s32.totalorder %s11, 1
    %p71 = scmp.ne.s32.totalorder %s66, %s68
    %p72 = scmp.eq.s32.totalorder %s11, 0
    %p73 = por %p71, %p72
    %p74 = scmp.ne.s32.totalorder %s66, %s68
    %p75 = scmp.eq.s32.totalorder %s16, 1
    %p76 = por %p74, %p75
    %p77 = scmp.ne.s32.totalorder %s68, %s69
    %p78 = scmp.eq.s32.totalorder %s16, 0
    %p79 = por %p77, %p78
    %p80 = scmp.ne.s32.totalorder %s68, %s69
    %p81 = scmp.eq.s32.totalorder %s17, 1
    %p82 = por %p80, %p81
    %p84 = scmp.ne.s32.totalorder %s69, %s83
    %p85 = scmp.eq.s32.totalorder %s17, 0
    %p86 = por %p84, %p85
    %s88 = sadd.s32 %s87, 1
    %p91 = scmp.eq.s32.totalorder %s11, 1
    %p92 = scmp.ne.s32.totalorder %s87, %s89
    %p93 = scmp.eq.s32.totalorder %s11, 0
    %p94 = por %p92, %p93
    %p95 = scmp.ne.s32.totalorder %s87, %s89
    %p96 = scmp.eq.s32.totalorder %s16, 1
    %p97 = por %p95, %p96
    %p98 = scmp.ne.s32.totalorder %s89, %s90
    %p99 = scmp.eq.s32.totalorder %s16, 0
    %p100 = por %p98, %p99
    %p101 = scmp.ne.s32.totalorder %s89, %s90
    %p102 = scmp.eq.s32.totalorder %s17, 1
    %p103 = por %p101, %p102
    %p105 = scmp.ne.s32.totalorder %s90, %s104
    %p106 = scmp.eq.s32.totalorder %s17, 0
    %p107 = por %p105, %p106
    %s109 = sadd.s32 %s108, 1
    %p112 = scmp.eq.s32.totalorder %s11, 1
    %p113 = scmp.ne.s32.totalorder %s108, %s110
    %p114 = scmp.eq.s32.totalorder %s11, 0
    %p115 = por %p113, %p114
    %p116 = scmp.ne.s32.totalorder %s108, %s110
    %p117 = scmp.eq.s32.totalorder %s16, 1
    %p118 = por %p116, %p117
    %p119 = scmp.ne.s32.totalorder %s110, %s111
    %p120 = scmp.eq.s32.totalorder %s16, 0
    %p121 = por %p119, %p120
    %p122 = scmp.ne.s32.totalorder %s110, %s111
    %p123 = scmp.eq.s32.totalorder %s17, 1
    %p124 = por %p122, %p123
    %p126 = scmp.ne.s32.totalorder %s111, %s125
    %p127 = scmp.eq.s32.totalorder %s17, 0
    %p128 = por %p126, %p127
    %s129 = ssub.s32 %s11, %s18
    %p130 = scmp.eq.s32.totalorder %s129, 0
    %s132 = sadd.s32 %s131, 1
    %s133 = scalar_select %p130, %s131, %s132
    %p136 = pneg %p130
    %p137 = scmp.eq.s32.totalorder %s11, 1
    %p138 = por %p136, %p137
    %p139 = scmp.ne.s32.totalorder %s131, %s134
    %p140 = scmp.eq.s32.totalorder %s11, 0
    %p141 = por %p139, %p140
    %p142 = scmp.ne.s32.totalorder %s131, %s134
    %p143 = scmp.eq.s32.totalorder %s16, 1
    %p144 = por %p142, %p143
    %p145 = scmp.ne.s32.totalorder %s134, %s135
    %p146 = scmp.eq.s32.totalorder %s16, 0
    %p147 = por %p145, %p146
    %p148 = scmp.ne.s32.totalorder %s134, %s135
    %p149 = scmp.eq.s32.totalorder %s17, 1
    %p150 = por %p148, %p149
    %p152 = scmp.ne.s32.totalorder %s135, %s151
    %p153 = scmp.eq.s32.totalorder %s17, 0
    %p154 = por %p152, %p153
    %p155 = scmp.le.s32.totalorder 1, %s11
    %p156 = scmp.lt.s32.totalorder %s11, 3
    %p157 = pnand %p155, %p156
    %p158 = pneg %p157
    // Predicated region
    $region9: #{net_forward.1} parent=5 // pred_check
      _
    $region10: #{net_forward.1} parent=5 // pred_check_branch
      %160 = sbr.rel (%p157) target = $region12
    $region11: #{net_forward.1} parent=5 // pred_region
      %s161 = ssub.s32 %s11, 1
      // Predicated region
      $region13: #{net_forward.1} parent=11 // pred_check
        %p162 = pneg %p58
      $region14: #{net_forward.1} parent=11 // pred_check_branch
        %164 = sbr.rel (%p162) target = $region16
      $region15: #{net_forward.1} parent=11 // pred_region
        _
      $region16: #{net_forward.1} parent=11 // pred_fallthru
        _
      // Predicated region
      $region17: #{net_forward.1} parent=11 // pred_check
        %p165 = pneg %p79
      $region18: #{net_forward.1} parent=11 // pred_check_branch
        %167 = sbr.rel (%p165) target = $region20
      $region19: #{net_forward.1} parent=11 // pred_region
        _
      $region20: #{net_forward.1} parent=11 // pred_fallthru
        _
      // Predicated region
      $region21: #{net_forward.1} parent=11 // pred_check
        %p168 = pneg %p100
      $region22: #{net_forward.1} parent=11 // pred_check_branch
        %170 = sbr.rel (%p168) target = $region24
      $region23: #{net_forward.1} parent=11 // pred_region
        _
      $region24: #{net_forward.1} parent=11 // pred_fallthru
        _
      // Predicated region
      $region25: #{net_forward.1} parent=11 // pred_check
        %p171 = pneg %p121
      $region26: #{net_forward.1} parent=11 // pred_check_branch
        %173 = sbr.rel (%p171) target = $region28
      $region27: #{net_forward.1} parent=11 // pred_region
        _
      $region28: #{net_forward.1} parent=11 // pred_fallthru
        _
    $region12: #{net_forward.1} parent=5 // pred_fallthru
      _
    %p174 = scmp.lt.s32.totalorder %s11, 2
    // Predicated region
    $region29: #{net_forward.1} parent=5 // pred_check
      %p175 = pneg %p174
    $region30: #{net_forward.1} parent=5 // pred_check_branch
      %177 = sbr.rel (%p175) target = $region32
    $region31: #{net_forward.1} parent=5 // pred_region
      // Predicated region
      $region33: #{net_forward.1} parent=31 // pred_check
        %p178 = pneg %p31
      $region34: #{net_forward.1} parent=31 // pred_check_branch
        %180 = sbr.rel (%p178) target = $region36
      $region35: #{net_forward.1} parent=31 // pred_region
        %s181 = smul.u32 64, %s11
        %p182 = scmp.lt.s32.totalorder %s181, 127
        %s183 = scalar_select %p182, %s181, 127
        %s184 = smul.addr %s183, 4
        %s185 = scalar_lea.vmem %s0, %s184
        %s186 = smul.u32 64, %s11
      $region36: #{net_forward.1} parent=31 // pred_fallthru
        _
    $region32: #{net_forward.1} parent=5 // pred_fallthru
      _
    %p187 = scmp.le.s32.totalorder 1, %s11
    %p188 = scmp.lt.s32.totalorder %s11, 3
    %p189 = pnand %p187, %p188
    %p190 = pneg %p189
    // Predicated region
    $region37: #{net_forward.1} parent=5 // pred_check
      _
    $region38: #{net_forward.1} parent=5 // pred_check_branch
      %192 = sbr.rel (%p189) target = $region40
    $region39: #{net_forward.1} parent=5 // pred_region
      %s193 = ssub.s32 %s11, 1
      %s194 = smul.u32 64, %s16
      %p195 = scmp.lt.s32.totalorder %s194, 127
      %s196 = scalar_select %p195, %s194, 127
      %s197 = smul.addr %s196, 4
      %s198 = scalar_lea.vmem %s0, %s197
      %p199 = pneg %p37
      %p200 = pneg %p34
      %p201 = pneg %p58
      %p202 = pneg %p55
      %p203 = pneg %p79
      %p204 = pneg %p76
      %p205 = pneg %p100
      %p206 = pneg %p97
      %p207 = pneg %p121
      %p208 = pneg %p118
      %p209 = pneg %p147
      %p210 = pneg %p144
      %s211 = smul.u32 64, %s16
      %p212 = scmp.lt.s32.totalorder %s211, 127
      %s213 = scalar_select %p212, %s211, 127
      %s214 = smul.addr %s213, 8
      %s215 = scalar_lea.vmem %s5, %s214
      %s216 = smul.u32 64, %s16
      %p217 = scmp.lt.s32.totalorder %s216, 127
      %s218 = scalar_select %p217, %s216, 127
      %s219 = smul.addr %s218, 4
      %s220 = scalar_lea.vmem %s0, %s219
      %s221 = smul.u32 64, %s16
      %s222 = smul.u32 64, %s16
      %p223 = scmp.lt.s32.totalorder %s222, 127
      %s224 = scalar_select %p223, %s222, 127
      %s225 = smul.addr %s224, 8
      %s226 = scalar_lea.vmem %s5, %s225
      %s227 = smul.u32 64, %s16
      %v229 = vld [vmem:[%s220] sm:$0xf]
      %v230 = vld [vmem:[%s220 + $0x4] sm:$0xf]
      %v231 = vld [vmem:[%s220 + $0x8] sm:$0xf]
      %v232 = vld [vmem:[%s220 + $0xc] sm:$0xf]
      %v233 = vld [vmem:[%s220 + $0x10] sm:$0xf]
      %v234 = vld [vmem:[%s220 + $0x14] sm:$0xf]
      %v235 = vld [vmem:[%s220 + $0x18] sm:$0xf]
      %v236 = vld [vmem:[%s220 + $0x1c] sm:$0xf]
      %v237 = vld [vmem:[%s220 + $0x20] sm:$0xf]
      %v238 = vld [vmem:[%s220 + $0x24] sm:$0xf]
      %v239 = vld [vmem:[%s220 + $0x28] sm:$0xf]
      %v240 = vld [vmem:[%s220 + $0x2c] sm:$0xf]
      %v241 = vld [vmem:[%s220 + $0x30] sm:$0xf]
      %v242 = vld [vmem:[%s220 + $0x34] sm:$0xf]
      %v243 = vld [vmem:[%s220 + $0x38] sm:$0xf]
      %v244 = vld [vmem:[%s220 + $0x3c] sm:$0xf]
      %v245 = vld [vmem:[%s220 + $0x40] sm:$0xf]
      %v246 = vld [vmem:[%s220 + $0x44] sm:$0xf]
      %v247 = vld [vmem:[%s220 + $0x48] sm:$0xf]
      %v248 = vld [vmem:[%s220 + $0x4c] sm:$0xf]
      %v249 = vld [vmem:[%s220 + $0x50] sm:$0xf]
      %v250 = vld [vmem:[%s220 + $0x54] sm:$0xf]
      %v251 = vld [vmem:[%s220 + $0x58] sm:$0xf]
      %v252 = vld [vmem:[%s220 + $0x5c] sm:$0xf]
      %v253 = vld [vmem:[%s220 + $0x60] sm:$0xf]
      %v254 = vld [vmem:[%s220 + $0x64] sm:$0xf]
      %v255 = vld [vmem:[%s220 + $0x68] sm:$0xf]
      %v256 = vld [vmem:[%s220 + $0x6c] sm:$0xf]
      %v257 = vld [vmem:[%s220 + $0x70] sm:$0xf]
      %v258 = vld [vmem:[%s220 + $0x74] sm:$0xf]
      %v259 = vld [vmem:[%s220 + $0x78] sm:$0xf]
      %v260 = vld [vmem:[%s220 + $0x7c] sm:$0xf]
      %v261 = vld [vmem:[%s220 + $0x80] sm:$0xf]
      %v262 = vld [vmem:[%s220 + $0x84] sm:$0xf]
      %v263 = vld [vmem:[%s220 + $0x88] sm:$0xf]
      %v264 = vld [vmem:[%s220 + $0x8c] sm:$0xf]
      %v265 = vld [vmem:[%s220 + $0x90] sm:$0xf]
      %v266 = vld [vmem:[%s220 + $0x94] sm:$0xf]
      %v267 = vld [vmem:[%s220 + $0x98] sm:$0xf]
      %v268 = vld [vmem:[%s220 + $0x9c] sm:$0xf]
      %v269 = vld [vmem:[%s220 + $0xa0] sm:$0xf]
      %v270 = vld [vmem:[%s220 + $0xa4] sm:$0xf]
      %v271 = vld [vmem:[%s220 + $0xa8] sm:$0xf]
      %v272 = vld [vmem:[%s220 + $0xac] sm:$0xf]
      %v273 = vld [vmem:[%s220 + $0xb0] sm:$0xf]
      %v274 = vld [vmem:[%s220 + $0xb4] sm:$0xf]
      %v275 = vld [vmem:[%s220 + $0xb8] sm:$0xf]
      %v276 = vld [vmem:[%s220 + $0xbc] sm:$0xf]
      %v277 = vld [vmem:[%s220 + $0xc0] sm:$0xf]
      %v278 = vld [vmem:[%s220 + $0xc4] sm:$0xf]
      %v279 = vld [vmem:[%s220 + $0xc8] sm:$0xf]
      %v280 = vld [vmem:[%s220 + $0xcc] sm:$0xf]
      %v281 = vld [vmem:[%s220 + $0xd0] sm:$0xf]
      %v282 = vld [vmem:[%s220 + $0xd4] sm:$0xf]
      %v283 = vld [vmem:[%s220 + $0xd8] sm:$0xf]
      %v284 = vld [vmem:[%s220 + $0xdc] sm:$0xf]
      %v285 = vld [vmem:[%s220 + $0xe0] sm:$0xf]
      %v286 = vld [vmem:[%s220 + $0xe4] sm:$0xf]
      %v287 = vld [vmem:[%s220 + $0xe8] sm:$0xf]
      %v288 = vld [vmem:[%s220 + $0xec] sm:$0xf]
      %v289 = vld [vmem:[%s220 + $0xf0] sm:$0xf]
      %v290 = vld [vmem:[%s220 + $0xf4] sm:$0xf]
      %v291 = vld [vmem:[%s220 + $0xf8] sm:$0xf]
      %v292 = vld [vmem:[%s220 + $0xfc] sm:$0xf]
      %v293 = vld [vmem:[%s1] sm:$0x3]
      %v294 = vld [vmem:[%s2] sm:$0x1]
      %v296 = vlaneseq
      %v297 = vshrl.u32 %v296, 7
      %v298 = vsub.s32 0, %v297
      %v299 = vrot.slane %v294, %v298
      %v365 = vunpack.c.l.b16 %v229
      %v366 = vunpack.c.l.b16 %v230
      %v367 = vunpack.c.l.b16 %v231
      %v368 = vunpack.c.l.b16 %v232
      %v369 = vunpack.c.l.b16 %v233
      %v370 = vunpack.c.l.b16 %v234
      %v371 = vunpack.c.l.b16 %v235
      %v372 = vunpack.c.l.b16 %v236
      %v373 = vunpack.c.l.b16 %v237
      %v374 = vunpack.c.l.b16 %v238
      %v375 = vunpack.c.l.b16 %v239
      %v376 = vunpack.c.l.b16 %v240
      %v377 = vunpack.c.l.b16 %v241
      %v378 = vunpack.c.l.b16 %v242
      %v379 = vunpack.c.l.b16 %v243
      %v380 = vunpack.c.l.b16 %v244
      %v381 = vunpack.c.l.b16 %v245
      %v382 = vunpack.c.l.b16 %v246
      %v383 = vunpack.c.l.b16 %v247
      %v384 = vunpack.c.l.b16 %v248
      %v385 = vunpack.c.l.b16 %v249
      %v386 = vunpack.c.l.b16 %v250
      %v387 = vunpack.c.l.b16 %v251
      %v388 = vunpack.c.l.b16 %v252
      %v389 = vunpack.c.l.b16 %v253
      %v390 = vunpack.c.l.b16 %v254
      %v391 = vunpack.c.l.b16 %v255
      %v392 = vunpack.c.l.b16 %v256
      %v393 = vunpack.c.l.b16 %v257
      %v394 = vunpack.c.l.b16 %v258
      %v395 = vunpack.c.l.b16 %v259
      %v396 = vunpack.c.l.b16 %v260
      %v397 = vunpack.c.l.b16 %v261
      %v398 = vunpack.c.l.b16 %v262
      %v399 = vunpack.c.l.b16 %v263
      %v400 = vunpack.c.l.b16 %v264
      %v401 = vunpack.c.l.b16 %v265
      %v402 = vunpack.c.l.b16 %v266
      %v403 = vunpack.c.l.b16 %v267
      %v404 = vunpack.c.l.b16 %v268
      %v405 = vunpack.c.l.b16 %v269
      %v406 = vunpack.c.l.b16 %v270
      %v407 = vunpack.c.l.b16 %v271
      %v408 = vunpack.c.l.b16 %v272
      %v409 = vunpack.c.l.b16 %v273
      %v410 = vunpack.c.l.b16 %v274
      %v411 = vunpack.c.l.b16 %v275
      %v412 = vunpack.c.l.b16 %v276
      %v413 = vunpack.c.l.b16 %v277
      %v414 = vunpack.c.l.b16 %v278
      %v415 = vunpack.c.l.b16 %v279
      %v416 = vunpack.c.l.b16 %v280
      %v417 = vunpack.c.l.b16 %v281
      %v418 = vunpack.c.l.b16 %v282
      %v419 = vunpack.c.l.b16 %v283
      %v420 = vunpack.c.l.b16 %v284
      %v421 = vunpack.c.l.b16 %v285
      %v422 = vunpack.c.l.b16 %v286
      %v423 = vunpack.c.l.b16 %v287
      %v424 = vunpack.c.l.b16 %v288
      %v425 = vunpack.c.l.b16 %v289
      %v426 = vunpack.c.l.b16 %v290
      %v427 = vunpack.c.l.b16 %v291
      %v428 = vunpack.c.l.b16 %v292
      %v429 = vpack.c.b16 %v366, %v365
      %v430 = vpack.c.b16 %v368, %v367
      %v431 = vpack.c.b16 %v370, %v369
      %v432 = vpack.c.b16 %v372, %v371
      %v433 = vpack.c.b16 %v374, %v373
      %v434 = vpack.c.b16 %v376, %v375
      %v435 = vpack.c.b16 %v378, %v377
      %v436 = vpack.c.b16 %v380, %v379
      %v437 = vpack.c.b16 %v382, %v381
      %v438 = vpack.c.b16 %v384, %v383
      %v439 = vpack.c.b16 %v386, %v385
      %v440 = vpack.c.b16 %v388, %v387
      %v441 = vpack.c.b16 %v390, %v389
      %v442 = vpack.c.b16 %v392, %v391
      %v443 = vpack.c.b16 %v394, %v393
      %v444 = vpack.c.b16 %v396, %v395
      %v445 = vpack.c.b16 %v398, %v397
      %v446 = vpack.c.b16 %v400, %v399
      %v447 = vpack.c.b16 %v402, %v401
      %v448 = vpack.c.b16 %v404, %v403
      %v449 = vpack.c.b16 %v406, %v405
      %v450 = vpack.c.b16 %v408, %v407
      %v451 = vpack.c.b16 %v410, %v409
      %v452 = vpack.c.b16 %v412, %v411
      %v453 = vpack.c.b16 %v414, %v413
      %v454 = vpack.c.b16 %v416, %v415
      %v455 = vpack.c.b16 %v418, %v417
      %v456 = vpack.c.b16 %v420, %v419
      %v457 = vpack.c.b16 %v422, %v421
      %v458 = vpack.c.b16 %v424, %v423
      %v459 = vpack.c.b16 %v426, %v425
      %v460 = vpack.c.b16 %v428, %v427
      %vm461 = vcmask 31744
      %v463 = vsel %vm461, %v429, 0
      %v466 = vsel %vm461, %v430, 0
      %v469 = vsel %vm461, %v431, 0
      %v472 = vsel %vm461, %v432, 0
      %v475 = vsel %vm461, %v433, 0
      %v478 = vsel %vm461, %v434, 0
      %v481 = vsel %vm461, %v435, 0
      %v484 = vsel %vm461, %v436, 0
      %v487 = vsel %vm461, %v437, 0
      %v490 = vsel %vm461, %v438, 0
      %v493 = vsel %vm461, %v439, 0
      %v496 = vsel %vm461, %v440, 0
      %v499 = vsel %vm461, %v441, 0
      %v502 = vsel %vm461, %v442, 0
      %v505 = vsel %vm461, %v443, 0
      %v508 = vsel %vm461, %v444, 0
      %v511 = vsel %vm461, %v445, 0
      %v514 = vsel %vm461, %v446, 0
      %v517 = vsel %vm461, %v447, 0
      %v520 = vsel %vm461, %v448, 0
      %v523 = vsel %vm461, %v449, 0
      %v526 = vsel %vm461, %v450, 0
      %v529 = vsel %vm461, %v451, 0
      %v532 = vsel %vm461, %v452, 0
      %v535 = vsel %vm461, %v453, 0
      %v538 = vsel %vm461, %v454, 0
      %v541 = vsel %vm461, %v455, 0
      %v544 = vsel %vm461, %v456, 0
      %v547 = vsel %vm461, %v457, 0
      %v550 = vsel %vm461, %v458, 0
      %v553 = vsel %vm461, %v459, 0
      %v556 = vsel %vm461, %v460, 0
      %vm558 = vcmask 1041408
      %v560 = vsel %vm558, %v293, 0
      %562 = vmatprep.subr.bf16.mxu0 0
      %563 = vmatpush1.bf16.msra.mxu0 %v560
      %564 = vmatprep.subr.bf16.mxu0 0
      %565 = vmatpush1.bf16.msra.mxu0 0
      %566 = vmatprep.subr.bf16.mxu0 0
      %567 = vmatpush1.bf16.msra.mxu0 0
      %568 = vmatprep.subr.bf16.mxu0 0
      %569 = vmatpush1.bf16.msra.mxu0 0
      %570 = vmatprep.subr.bf16.mxu0 0
      %571 = vmatpush1.bf16.msra.mxu0 0
      %572 = vmatprep.subr.bf16.mxu0 0
      %573 = vmatpush1.bf16.msra.mxu0 0
      %574 = vmatprep.subr.bf16.mxu0 0
      %575 = vmatpush1.bf16.msra.mxu0 0
      %576 = vmatprep.subr.bf16.mxu0 0
      %577 = vmatpush1.bf16.msra.mxu0 0
      %578 = vmatprep.subr.bf16.mxu0 0
      %579 = vmatpush1.bf16.msra.mxu0 0
      %580 = vmatprep.subr.bf16.mxu0 0
      %581 = vmatpush1.bf16.msra.mxu0 0
      %582 = vmatprep.subr.bf16.mxu0 0
      %583 = vmatpush1.bf16.msra.mxu0 0
      %584 = vmatprep.subr.bf16.mxu0 0
      %585 = vmatpush1.bf16.msra.mxu0 0
      %586 = vmatprep.subr.bf16.mxu0 0
      %587 = vmatpush1.bf16.msra.mxu0 0
      %588 = vmatprep.subr.bf16.mxu0 0
      %589 = vmatpush1.bf16.msra.mxu0 0
      %590 = vmatprep.subr.bf16.mxu0 0
      %591 = vmatpush1.bf16.msra.mxu0 0
      %592 = vmatprep.subr.bf16.mxu0 0
      %593 = vmatpush1.bf16.msra.mxu0 0
      %594 = vmatprep.mubr.bf16.mxu0 0
      %595 = vmatmul.mubr.bf16.gmra.mrb[0].mxu0 %v463
      %v596 = vpop.f32.mrb[0].mxu0
      %v597 = vadd.f32 %v299, %v596
      %v598 = vpop.f32.mrb[0].mxu0
      %v599 = vpop.f32.mrb[0].mxu0
      %v600 = vadd.f32 %v299, %v599
      %v601 = vpop.f32.mrb[0].mxu0
      %602 = vmatprep.mubr.bf16.mxu0 0
      %603 = vmatmul.mubr.bf16.gmra.mrb[0].mxu0 %v466
      %v604 = vpop.f32.mrb[0].mxu0
      %v605 = vadd.f32 %v299, %v604
      %v606 = vpop.f32.mrb[0].mxu0
      %v607 = vpop.f32.mrb[0].mxu0
      %v608 = vadd.f32 %v299, %v607
      %v609 = vpop.f32.mrb[0].mxu0
      %610 = vmatprep.mubr.bf16.mxu0 0
      %611 = vmatmul.mubr.bf16.gmra.mrb[0].mxu0 %v469
      %v612 = vpop.f32.mrb[0].mxu0
      %v613 = vadd.f32 %v299, %v612
      %v614 = vpop.f32.mrb[0].mxu0
      %v615 = vpop.f32.mrb[0].mxu0
      %v616 = vadd.f32 %v299, %v615
      %v617 = vpop.f32.mrb[0].mxu0
      %618 = vmatprep.mubr.bf16.mxu0 0
      %619 = vmatmul.mubr.bf16.gmra.mrb[0].mxu0 %v472
      %v620 = vpop.f32.mrb[0].mxu0
      %v621 = vadd.f32 %v299, %v620
      %v622 = vpop.f32.mrb[0].mxu0
      %v623 = vpop.f32.mrb[0].mxu0
      %v624 = vadd.f32 %v299, %v623
      %v625 = vpop.f32.mrb[0].mxu0
      %626 = vmatprep.mubr.bf16.mxu0 0
      %627 = vmatmul.mubr.bf16.gmra.mrb[0].mxu0 %v475
      %v628 = vpop.f32.mrb[0].mxu0
      %v629 = vadd.f32 %v299, %v628
      %v630 = vpop.f32.mrb[0].mxu0
      %v631 = vpop.f32.mrb[0].mxu0
      %v632 = vadd.f32 %v299, %v631
      %v633 = vpop.f32.mrb[0].mxu0
      %634 = vmatprep.mubr.bf16.mxu0 0
      %635 = vmatmul.mubr.bf16.gmra.mrb[0].mxu0 %v478
      %v636 = vpop.f32.mrb[0].mxu0
      %v637 = vadd.f32 %v299, %v636
      %v638 = vpop.f32.mrb[0].mxu0
      %v639 = vpop.f32.mrb[0].mxu0
      %v640 = vadd.f32 %v299, %v639
      %v641 = vpop.f32.mrb[0].mxu0
      %642 = vmatprep.mubr.bf16.mxu0 0
      %643 = vmatmul.mubr.bf16.gmra.mrb[0].mxu0 %v481
      %v644 = vpop.f32.mrb[0].mxu0
      %v645 = vadd.f32 %v299, %v644
      %v646 = vpop.f32.mrb[0].mxu0
      %v647 = vpop.f32.mrb[0].mxu0
      %v648 = vadd.f32 %v299, %v647
      %v649 = vpop.f32.mrb[0].mxu0
      %650 = vmatprep.mubr.bf16.mxu0 0
      %651 = vmatmul.mubr.bf16.gmra.mrb[0].mxu0 %v484
      %v652 = vpop.f32.mrb[0].mxu0
      %v653 = vadd.f32 %v299, %v652
      %v654 = vpop.f32.mrb[0].mxu0
      %v655 = vpop.f32.mrb[0].mxu0
      %v656 = vadd.f32 %v299, %v655
      %v657 = vpop.f32.mrb[0].mxu0
      %658 = vmatprep.mubr.bf16.mxu0 0
      %659 = vmatmul.mubr.bf16.gmra.mrb[0].mxu0 %v487
      %v660 = vpop.f32.mrb[0].mxu0
      %v661 = vadd.f32 %v299, %v660
      %v662 = vpop.f32.mrb[0].mxu0
      %v663 = vpop.f32.mrb[0].mxu0
      %v664 = vadd.f32 %v299, %v663
      %v665 = vpop.f32.mrb[0].mxu0
      %666 = vmatprep.mubr.bf16.mxu0 0
      %667 = vmatmul.mubr.bf16.gmra.mrb[0].mxu0 %v490
      %v668 = vpop.f32.mrb[0].mxu0
      %v669 = vadd.f32 %v299, %v668
      %v670 = vpop.f32.mrb[0].mxu0
      %v671 = vpop.f32.mrb[0].mxu0
      %v672 = vadd.f32 %v299, %v671
      %v673 = vpop.f32.mrb[0].mxu0
      %674 = vmatprep.mubr.bf16.mxu0 0
      %675 = vmatmul.mubr.bf16.gmra.mrb[0].mxu0 %v493
      %v676 = vpop.f32.mrb[0].mxu0
      %v677 = vadd.f32 %v299, %v676
      %v678 = vpop.f32.mrb[0].mxu0
      %v679 = vpop.f32.mrb[0].mxu0
      %v680 = vadd.f32 %v299, %v679
      %v681 = vpop.f32.mrb[0].mxu0
      %682 = vmatprep.mubr.bf16.mxu0 0
      %683 = vmatmul.mubr.bf16.gmra.mrb[0].mxu0 %v496
      %v684 = vpop.f32.mrb[0].mxu0
      %v685 = vadd.f32 %v299, %v684
      %v686 = vpop.f32.mrb[0].mxu0
      %v687 = vpop.f32.mrb[0].mxu0
      %v688 = vadd.f32 %v299, %v687
      %v689 = vpop.f32.mrb[0].mxu0
      %690 = vmatprep.mubr.bf16.mxu0 0
      %691 = vmatmul.mubr.bf16.gmra.mrb[0].mxu0 %v499
      %v692 = vpop.f32.mrb[0].mxu0
      %v693 = vadd.f32 %v299, %v692
      %v694 = vpop.f32.mrb[0].mxu0
      %v695 = vpop.f32.mrb[0].mxu0
      %v696 = vadd.f32 %v299, %v695
      %v697 = vpop.f32.mrb[0].mxu0
      %698 = vmatprep.mubr.bf16.mxu0 0
      %699 = vmatmul.mubr.bf16.gmra.mrb[0].mxu0 %v502
      %v700 = vpop.f32.mrb[0].mxu0
      %v701 = vadd.f32 %v299, %v700
      %v702 = vpop.f32.mrb[0].mxu0
      %v703 = vpop.f32.mrb[0].mxu0
      %v704 = vadd.f32 %v299, %v703
      %v705 = vpop.f32.mrb[0].mxu0
      %706 = vmatprep.mubr.bf16.mxu0 0
      %707 = vmatmul.mubr.bf16.gmra.mrb[0].mxu0 %v505
      %v708 = vpop.f32.mrb[0].mxu0
      %v709 = vadd.f32 %v299, %v708
      %v710 = vpop.f32.mrb[0].mxu0
      %v711 = vpop.f32.mrb[0].mxu0
      %v712 = vadd.f32 %v299, %v711
      %v713 = vpop.f32.mrb[0].mxu0
      %714 = vmatprep.mubr.bf16.mxu0 0
      %715 = vmatmul.mubr.bf16.gmra.mrb[0].mxu0 %v508
      %v716 = vpop.f32.mrb[0].mxu0
      %v717 = vadd.f32 %v299, %v716
      %v718 = vpop.f32.mrb[0].mxu0
      %v719 = vpop.f32.mrb[0].mxu0
      %v720 = vadd.f32 %v299, %v719
      %v721 = vpop.f32.mrb[0].mxu0
      %722 = vmatprep.mubr.bf16.mxu0 0
      %723 = vmatmul.mubr.bf16.gmra.mrb[0].mxu0 %v511
      %v724 = vpop.f32.mrb[0].mxu0
      %v725 = vadd.f32 %v299, %v724
      %v726 = vpop.f32.mrb[0].mxu0
      %v727 = vpop.f32.mrb[0].mxu0
      %v728 = vadd.f32 %v299, %v727
      %v729 = vpop.f32.mrb[0].mxu0
      %730 = vmatprep.mubr.bf16.mxu0 0
      %731 = vmatmul.mubr.bf16.gmra.mrb[0].mxu0 %v514
      %v732 = vpop.f32.mrb[0].mxu0
      %v733 = vadd.f32 %v299, %v732
      %v734 = vpop.f32.mrb[0].mxu0
      %v735 = vpop.f32.mrb[0].mxu0
      %v736 = vadd.f32 %v299, %v735
      %v737 = vpop.f32.mrb[0].mxu0
      %738 = vmatprep.mubr.bf16.mxu0 0
      %739 = vmatmul.mubr.bf16.gmra.mrb[0].mxu0 %v517
      %v740 = vpop.f32.mrb[0].mxu0
      %v741 = vadd.f32 %v299, %v740
      %v742 = vpop.f32.mrb[0].mxu0
      %v743 = vpop.f32.mrb[0].mxu0
      %v744 = vadd.f32 %v299, %v743
      %v745 = vpop.f32.mrb[0].mxu0
      %746 = vmatprep.mubr.bf16.mxu0 0
      %747 = vmatmul.mubr.bf16.gmra.mrb[0].mxu0 %v520
      %v748 = vpop.f32.mrb[0].mxu0
      %v749 = vadd.f32 %v299, %v748
      %v750 = vpop.f32.mrb[0].mxu0
      %v751 = vpop.f32.mrb[0].mxu0
      %v752 = vadd.f32 %v299, %v751
      %v753 = vpop.f32.mrb[0].mxu0
      %754 = vmatprep.mubr.bf16.mxu0 0
      %755 = vmatmul.mubr.bf16.gmra.mrb[0].mxu0 %v523
      %v756 = vpop.f32.mrb[0].mxu0
      %v757 = vadd.f32 %v299, %v756
      %v758 = vpop.f32.mrb[0].mxu0
      %v759 = vpop.f32.mrb[0].mxu0
      %v760 = vadd.f32 %v299, %v759
      %v761 = vpop.f32.mrb[0].mxu0
      %762 = vmatprep.mubr.bf16.mxu0 0
      %763 = vmatmul.mubr.bf16.gmra.mrb[0].mxu0 %v526
      %v764 = vpop.f32.mrb[0].mxu0
      %v765 = vadd.f32 %v299, %v764
      %v766 = vpop.f32.mrb[0].mxu0
      %v767 = vpop.f32.mrb[0].mxu0
      %v768 = vadd.f32 %v299, %v767
      %v769 = vpop.f32.mrb[0].mxu0
      %770 = vmatprep.mubr.bf16.mxu0 0
      %771 = vmatmul.mubr.bf16.gmra.mrb[0].mxu0 %v529
      %v772 = vpop.f32.mrb[0].mxu0
      %v773 = vadd.f32 %v299, %v772
      %v774 = vpop.f32.mrb[0].mxu0
      %v775 = vpop.f32.mrb[0].mxu0
      %v776 = vadd.f32 %v299, %v775
      %v777 = vpop.f32.mrb[0].mxu0
      %778 = vmatprep.mubr.bf16.mxu0 0
      %779 = vmatmul.mubr.bf16.gmra.mrb[0].mxu0 %v532
      %v780 = vpop.f32.mrb[0].mxu0
      %v781 = vadd.f32 %v299, %v780
      %v782 = vpop.f32.mrb[0].mxu0
      %v783 = vpop.f32.mrb[0].mxu0
      %v784 = vadd.f32 %v299, %v783
      %v785 = vpop.f32.mrb[0].mxu0
      %786 = vmatprep.mubr.bf16.mxu0 0
      %787 = vmatmul.mubr.bf16.gmra.mrb[0].mxu0 %v535
      %v788 = vpop.f32.mrb[0].mxu0
      %v789 = vadd.f32 %v299, %v788
      %v790 = vpop.f32.mrb[0].mxu0
      %v791 = vpop.f32.mrb[0].mxu0
      %v792 = vadd.f32 %v299, %v791
      %v793 = vpop.f32.mrb[0].mxu0
      %794 = vmatprep.mubr.bf16.mxu0 0
      %795 = vmatmul.mubr.bf16.gmra.mrb[0].mxu0 %v538
      %v796 = vpop.f32.mrb[0].mxu0
      %v797 = vadd.f32 %v299, %v796
      %v798 = vpop.f32.mrb[0].mxu0
      %v799 = vpop.f32.mrb[0].mxu0
      %v800 = vadd.f32 %v299, %v799
      %v801 = vpop.f32.mrb[0].mxu0
      %802 = vmatprep.mubr.bf16.mxu0 0
      %803 = vmatmul.mubr.bf16.gmra.mrb[0].mxu0 %v541
      %v804 = vpop.f32.mrb[0].mxu0
      %v805 = vadd.f32 %v299, %v804
      %v806 = vpop.f32.mrb[0].mxu0
      %v807 = vpop.f32.mrb[0].mxu0
      %v808 = vadd.f32 %v299, %v807
      %v809 = vpop.f32.mrb[0].mxu0
      %810 = vmatprep.mubr.bf16.mxu0 0
      %811 = vmatmul.mubr.bf16.gmra.mrb[0].mxu0 %v544
      %v812 = vpop.f32.mrb[0].mxu0
      %v813 = vadd.f32 %v299, %v812
      %v814 = vpop.f32.mrb[0].mxu0
      %v815 = vpop.f32.mrb[0].mxu0
      %v816 = vadd.f32 %v299, %v815
      %v817 = vpop.f32.mrb[0].mxu0
      %818 = vmatprep.mubr.bf16.mxu0 0
      %819 = vmatmul.mubr.bf16.gmra.mrb[0].mxu0 %v547
      %v820 = vpop.f32.mrb[0].mxu0
      %v821 = vadd.f32 %v299, %v820
      %v822 = vpop.f32.mrb[0].mxu0
      %v823 = vpop.f32.mrb[0].mxu0
      %v824 = vadd.f32 %v299, %v823
      %v825 = vpop.f32.mrb[0].mxu0
      %826 = vmatprep.mubr.bf16.mxu0 0
      %827 = vmatmul.mubr.bf16.gmra.mrb[0].mxu0 %v550
      %v828 = vpop.f32.mrb[0].mxu0
      %v829 = vadd.f32 %v299, %v828
      %v830 = vpop.f32.mrb[0].mxu0
      %v831 = vpop.f32.mrb[0].mxu0
      %v832 = vadd.f32 %v299, %v831
      %v833 = vpop.f32.mrb[0].mxu0
      %834 = vmatprep.mubr.bf16.mxu0 0
      %835 = vmatmul.mubr.bf16.gmra.mrb[0].mxu0 %v553
      %v836 = vpop.f32.mrb[0].mxu0
      %v837 = vadd.f32 %v299, %v836
      %v838 = vpop.f32.mrb[0].mxu0
      %v839 = vpop.f32.mrb[0].mxu0
      %v840 = vadd.f32 %v299, %v839
      %v841 = vpop.f32.mrb[0].mxu0
      %842 = vmatprep.mubr.bf16.mxu0 0
      %843 = vmatmul.mubr.bf16.gmra.mrb[0].mxu0 %v556
      %v844 = vpop.f32.mrb[0].mxu0
      %v845 = vadd.f32 %v299, %v844
      %v846 = vpop.f32.mrb[0].mxu0
      %v847 = vpop.f32.mrb[0].mxu0
      %v848 = vadd.f32 %v299, %v847
      %v849 = vpop.f32.mrb[0].mxu0
      %850 = vdwg.mxu0
      %v851 = vmax.f32 %v597, 0.0
      %v852 = vmax.f32 %v600, 0.0
      %v853 = vmax.f32 %v605, 0.0
      %v854 = vmax.f32 %v608, 0.0
      %v855 = vmax.f32 %v613, 0.0
      %v856 = vmax.f32 %v616, 0.0
      %v857 = vmax.f32 %v621, 0.0
      %v858 = vmax.f32 %v624, 0.0
      %v859 = vmax.f32 %v629, 0.0
      %v860 = vmax.f32 %v632, 0.0
      %v861 = vmax.f32 %v637, 0.0
      %v862 = vmax.f32 %v640, 0.0
      %v863 = vmax.f32 %v645, 0.0
      %v864 = vmax.f32 %v648, 0.0
      %v865 = vmax.f32 %v653, 0.0
      %v866 = vmax.f32 %v656, 0.0
      %v867 = vmax.f32 %v661, 0.0
      %v868 = vmax.f32 %v664, 0.0
      %v869 = vmax.f32 %v669, 0.0
      %v870 = vmax.f32 %v672, 0.0
      %v871 = vmax.f32 %v677, 0.0
      %v872 = vmax.f32 %v680, 0.0
      %v873 = vmax.f32 %v685, 0.0
      %v874 = vmax.f32 %v688, 0.0
      %v875 = vmax.f32 %v693, 0.0
      %v876 = vmax.f32 %v696, 0.0
      %v877 = vmax.f32 %v701, 0.0
      %v878 = vmax.f32 %v704, 0.0
      %v879 = vmax.f32 %v709, 0.0
      %v880 = vmax.f32 %v712, 0.0
      %v881 = vmax.f32 %v717, 0.0
      %v882 = vmax.f32 %v720, 0.0
      %v883 = vmax.f32 %v725, 0.0
      %v884 = vmax.f32 %v728, 0.0
      %v885 = vmax.f32 %v733, 0.0
      %v886 = vmax.f32 %v736, 0.0
      %v887 = vmax.f32 %v741, 0.0
      %v888 = vmax.f32 %v744, 0.0
      %v889 = vmax.f32 %v749, 0.0
      %v890 = vmax.f32 %v752, 0.0
      %v891 = vmax.f32 %v757, 0.0
      %v892 = vmax.f32 %v760, 0.0
      %v893 = vmax.f32 %v765, 0.0
      %v894 = vmax.f32 %v768, 0.0
      %v895 = vmax.f32 %v773, 0.0
      %v896 = vmax.f32 %v776, 0.0
      %v897 = vmax.f32 %v781, 0.0
      %v898 = vmax.f32 %v784, 0.0
      %v899 = vmax.f32 %v789, 0.0
      %v900 = vmax.f32 %v792, 0.0
      %v901 = vmax.f32 %v797, 0.0
      %v902 = vmax.f32 %v800, 0.0
      %v903 = vmax.f32 %v805, 0.0
      %v904 = vmax.f32 %v808, 0.0
      %v905 = vmax.f32 %v813, 0.0
      %v906 = vmax.f32 %v816, 0.0
      %v907 = vmax.f32 %v821, 0.0
      %v908 = vmax.f32 %v824, 0.0
      %v909 = vmax.f32 %v829, 0.0
      %v910 = vmax.f32 %v832, 0.0
      %v911 = vmax.f32 %v837, 0.0
      %v912 = vmax.f32 %v840, 0.0
      %v913 = vmax.f32 %v845, 0.0
      %v914 = vmax.f32 %v848, 0.0
      %v915 = vld [vmem:[%s3] sm:$0xff]
      %v916 = vld [vmem:[%s3 + $0x8] sm:$0xff]
      %v917 = vld [vmem:[%s3 + $0x10] sm:$0xff]
      %v918 = vld [vmem:[%s3 + $0x18] sm:$0xff]
      %v919 = vld [vmem:[%s4] sm:$0x1]
      %v921 = vlaneseq
      %v922 = vshrl.u32 %v921, 7
      %v923 = vsub.s32 0, %v922
      %v924 = vrot.slane %v919, %v923
      %vm926 = vcmask 261120
      %v928 = vsel %vm926, %v851, 0
      %v931 = vsel %vm926, %v852, 0
      %v934 = vsel %vm926, %v853, 0
      %v937 = vsel %vm926, %v854, 0
      %v940 = vsel %vm926, %v855, 0
      %v943 = vsel %vm926, %v856, 0
      %v946 = vsel %vm926, %v857, 0
      %v949 = vsel %vm926, %v858, 0
      %v952 = vsel %vm926, %v859, 0
      %v955 = vsel %vm926, %v860, 0
      %v958 = vsel %vm926, %v861, 0
      %v961 = vsel %vm926, %v862, 0
      %v964 = vsel %vm926, %v863, 0
      %v967 = vsel %vm926, %v864, 0
      %v970 = vsel %vm926, %v865, 0
      %v973 = vsel %vm926, %v866, 0
      %v976 = vsel %vm926, %v867, 0
      %v979 = vsel %vm926, %v868, 0
      %v982 = vsel %vm926, %v869, 0
      %v985 = vsel %vm926, %v870, 0
      %v988 = vsel %vm926, %v871, 0
      %v991 = vsel %vm926, %v872, 0
      %v994 = vsel %vm926, %v873, 0
      %v997 = vsel %vm926, %v874, 0
      %v1000 = vsel %vm926, %v875, 0
      %v1003 = vsel %vm926, %v876, 0
      %v1006 = vsel %vm926, %v877, 0
      %v1009 = vsel %vm926, %v878, 0
      %v1012 = vsel %vm926, %v879, 0
      %v1015 = vsel %vm926, %v880, 0
      %v1018 = vsel %vm926, %v881, 0
      %v1021 = vsel %vm926, %v882, 0
      %v1024 = vsel %vm926, %v883, 0
      %v1027 = vsel %vm926, %v884, 0
      %v1030 = vsel %vm926, %v885, 0
      %v1033 = vsel %vm926, %v886, 0
      %v1036 = vsel %vm926, %v887, 0
      %v1039 = vsel %vm926, %v888, 0
      %v1042 = vsel %vm926, %v889, 0
      %v1045 = vsel %vm926, %v890, 0
      %v1048 = vsel %vm926, %v891, 0
      %v1051 = vsel %vm926, %v892, 0
      %v1054 = vsel %vm926, %v893, 0
      %v1057 = vsel %vm926, %v894, 0
      %v1060 = vsel %vm926, %v895, 0
      %v1063 = vsel %vm926, %v896, 0
      %v1066 = vsel %vm926, %v897, 0
      %v1069 = vsel %vm926, %v898, 0
      %v1072 = vsel %vm926, %v899, 0
      %v1075 = vsel %vm926, %v900, 0
      %v1078 = vsel %vm926, %v901, 0
      %v1081 = vsel %vm926, %v902, 0
      %v1084 = vsel %vm926, %v903, 0
      %v1087 = vsel %vm926, %v904, 0
      %v1090 = vsel %vm926, %v905, 0
      %v1093 = vsel %vm926, %v906, 0
      %v1096 = vsel %vm926, %v907, 0
      %v1099 = vsel %vm926, %v908, 0
      %v1102 = vsel %vm926, %v909, 0
      %v1105 = vsel %vm926, %v910, 0
      %v1108 = vsel %vm926, %v911, 0
      %v1111 = vsel %vm926, %v912, 0
      %v1114 = vsel %vm926, %v913, 0
      %v1117 = vsel %vm926, %v914, 0
      %1119 = vmatprep.subr.mxu0 0.0
      %1120 = vmatpush1.msra.mxu0 %v915
      %1121 = vmatprep.subr.mxu0 0.0
      %1122 = vmatpush1.msra.mxu0 %v916
      %1123 = vmatprep.subr.mxu0 0.0
      %1124 = vmatpush1.msra.mxu0 %v917
      %1125 = vmatprep.subr.mxu0 0.0
      %1126 = vmatpush1.msra.mxu0 %v918
      %1127 = vmatprep.subr.mxu0 0.0
      %1128 = vmatpush1.msra.mxu0 0.0
      %1129 = vmatprep.subr.mxu0 0.0
      %1130 = vmatpush1.msra.mxu0 0.0
      %1131 = vmatprep.subr.mxu0 0.0
      %1132 = vmatpush1.msra.mxu0 0.0
      %1133 = vmatprep.subr.mxu0 0.0
      %1134 = vmatpush1.msra.mxu0 0.0
      %1135 = vmatprep.subr.mxu0 0.0
      %1136 = vmatpush1.msra.mxu0 0.0
      %1137 = vmatprep.subr.mxu0 0.0
      %1138 = vmatpush1.msra.mxu0 0.0
      %1139 = vmatprep.subr.mxu0 0.0
      %1140 = vmatpush1.msra.mxu0 0.0
      %1141 = vmatprep.subr.mxu0 0.0
      %1142 = vmatpush1.msra.mxu0 0.0
      %1143 = vmatprep.subr.mxu0 0.0
      %1144 = vmatpush1.msra.mxu0 0.0
      %1145 = vmatprep.subr.mxu0 0.0
      %1146 = vmatpush1.msra.mxu0 0.0
      %1147 = vmatprep.subr.mxu0 0.0
      %1148 = vmatpush1.msra.mxu0 0.0
      %1149 = vmatprep.subr.mxu0 0.0
      %1150 = vmatpush1.msra.mxu0 0.0
      %1151 = vmatprep.subr.mxu0 0.0
      %1152 = vmatpush1.msra.mxu0 0.0
      %1153 = vmatprep.subr.mxu0 0.0
      %1154 = vmatpush1.msra.mxu0 0.0
      %1155 = vmatprep.subr.mxu0 0.0
      %1156 = vmatpush1.msra.mxu0 0.0
      %1157 = vmatprep.subr.mxu0 0.0
      %1158 = vmatpush1.msra.mxu0 0.0
      %1159 = vmatprep.subr.mxu0 0.0
      %1160 = vmatpush1.msra.mxu0 0.0
      %1161 = vmatprep.subr.mxu0 0.0
      %1162 = vmatpush1.msra.mxu0 0.0
      %1163 = vmatprep.subr.mxu0 0.0
      %1164 = vmatpush1.msra.mxu0 0.0
      %1165 = vmatprep.subr.mxu0 0.0
      %1166 = vmatpush1.msra.mxu0 0.0
      %1167 = vmatprep.subr.mxu0 0.0
      %1168 = vmatpush1.msra.mxu0 0.0
      %1169 = vmatprep.subr.mxu0 0.0
      %1170 = vmatpush1.msra.mxu0 0.0
      %1171 = vmatprep.subr.mxu0 0.0
      %1172 = vmatpush1.msra.mxu0 0.0
      %1173 = vmatprep.subr.mxu0 0.0
      %1174 = vmatpush1.msra.mxu0 0.0
      %1175 = vmatprep.subr.mxu0 0.0
      %1176 = vmatpush1.msra.mxu0 0.0
      %1177 = vmatprep.subr.mxu0 0.0
      %1178 = vmatpush1.msra.mxu0 0.0
      %1179 = vmatprep.subr.mxu0 0.0
      %1180 = vmatpush1.msra.mxu0 0.0
      %1181 = vmatprep.subr.mxu0 0.0
      %1182 = vmatpush1.msra.mxu0 0.0
      %1183 = vmatprep.mubr.f32.mxu0 0.0
      %1184 = vmatmul.mubr.f32.gmra.mrb[0].mxu0 %v928
      %v1185 = vpop.f32.mrb[0].mxu0
      %v1186 = vadd.f32 %v924, %v1185
      %v1187 = vpop.f32.mrb[0].mxu0
      %1188 = vmatprep.mubr.f32.mxu0 0.0
      %1189 = vmatmul.mubr.f32.gmra.mrb[0].mxu0 %v931
      %v1190 = vpop.f32.mrb[0].mxu0
      %v1191 = vadd.f32 %v924, %v1190
      %v1192 = vpop.f32.mrb[0].mxu0
      %1193 = vmatprep.mubr.f32.mxu0 0.0
      %1194 = vmatmul.mubr.f32.gmra.mrb[0].mxu0 %v934
      %v1195 = vpop.f32.mrb[0].mxu0
      %v1196 = vadd.f32 %v924, %v1195
      %v1197 = vpop.f32.mrb[0].mxu0
      %1198 = vmatprep.mubr.f32.mxu0 0.0
      %1199 = vmatmul.mubr.f32.gmra.mrb[0].mxu0 %v937
      %v1200 = vpop.f32.mrb[0].mxu0
      %v1201 = vadd.f32 %v924, %v1200
      %v1202 = vpop.f32.mrb[0].mxu0
      %1203 = vmatprep.mubr.f32.mxu0 0.0
      %1204 = vmatmul.mubr.f32.gmra.mrb[0].mxu0 %v940
      %v1205 = vpop.f32.mrb[0].mxu0
      %v1206 = vadd.f32 %v924, %v1205
      %v1207 = vpop.f32.mrb[0].mxu0
      %1208 = vmatprep.mubr.f32.mxu0 0.0
      %1209 = vmatmul.mubr.f32.gmra.mrb[0].mxu0 %v943
      %v1210 = vpop.f32.mrb[0].mxu0
      %v1211 = vadd.f32 %v924, %v1210
      %v1212 = vpop.f32.mrb[0].mxu0
      %1213 = vmatprep.mubr.f32.mxu0 0.0
      %1214 = vmatmul.mubr.f32.gmra.mrb[0].mxu0 %v946
      %v1215 = vpop.f32.mrb[0].mxu0
      %v1216 = vadd.f32 %v924, %v1215
      %v1217 = vpop.f32.mrb[0].mxu0
      %1218 = vmatprep.mubr.f32.mxu0 0.0
      %1219 = vmatmul.mubr.f32.gmra.mrb[0].mxu0 %v949
      %v1220 = vpop.f32.mrb[0].mxu0
      %v1221 = vadd.f32 %v924, %v1220
      %v1222 = vpop.f32.mrb[0].mxu0
      %1223 = vmatprep.mubr.f32.mxu0 0.0
      %1224 = vmatmul.mubr.f32.gmra.mrb[0].mxu0 %v952
      %v1225 = vpop.f32.mrb[0].mxu0
      %v1226 = vadd.f32 %v924, %v1225
      %v1227 = vpop.f32.mrb[0].mxu0
      %1228 = vmatprep.mubr.f32.mxu0 0.0
      %1229 = vmatmul.mubr.f32.gmra.mrb[0].mxu0 %v955
      %v1230 = vpop.f32.mrb[0].mxu0
      %v1231 = vadd.f32 %v924, %v1230
      %v1232 = vpop.f32.mrb[0].mxu0
      %1233 = vmatprep.mubr.f32.mxu0 0.0
      %1234 = vmatmul.mubr.f32.gmra.mrb[0].mxu0 %v958
      %v1235 = vpop.f32.mrb[0].mxu0
      %v1236 = vadd.f32 %v924, %v1235
      %v1237 = vpop.f32.mrb[0].mxu0
      %1238 = vmatprep.mubr.f32.mxu0 0.0
      %1239 = vmatmul.mubr.f32.gmra.mrb[0].mxu0 %v961
      %v1240 = vpop.f32.mrb[0].mxu0
      %v1241 = vadd.f32 %v924, %v1240
      %v1242 = vpop.f32.mrb[0].mxu0
      %1243 = vmatprep.mubr.f32.mxu0 0.0
      %1244 = vmatmul.mubr.f32.gmra.mrb[0].mxu0 %v964
      %v1245 = vpop.f32.mrb[0].mxu0
      %v1246 = vadd.f32 %v924, %v1245
      %v1247 = vpop.f32.mrb[0].mxu0
      %1248 = vmatprep.mubr.f32.mxu0 0.0
      %1249 = vmatmul.mubr.f32.gmra.mrb[0].mxu0 %v967
      %v1250 = vpop.f32.mrb[0].mxu0
      %v1251 = vadd.f32 %v924, %v1250
      %v1252 = vpop.f32.mrb[0].mxu0
      %1253 = vmatprep.mubr.f32.mxu0 0.0
      %1254 = vmatmul.mubr.f32.gmra.mrb[0].mxu0 %v970
      %v1255 = vpop.f32.mrb[0].mxu0
      %v1256 = vadd.f32 %v924, %v1255
      %v1257 = vpop.f32.mrb[0].mxu0
      %1258 = vmatprep.mubr.f32.mxu0 0.0
      %1259 = vmatmul.mubr.f32.gmra.mrb[0].mxu0 %v973
      %v1260 = vpop.f32.mrb[0].mxu0
      %v1261 = vadd.f32 %v924, %v1260
      %v1262 = vpop.f32.mrb[0].mxu0
      %1263 = vmatprep.mubr.f32.mxu0 0.0
      %1264 = vmatmul.mubr.f32.gmra.mrb[0].mxu0 %v976
      %v1265 = vpop.f32.mrb[0].mxu0
      %v1266 = vadd.f32 %v924, %v1265
      %v1267 = vpop.f32.mrb[0].mxu0
      %1268 = vmatprep.mubr.f32.mxu0 0.0
      %1269 = vmatmul.mubr.f32.gmra.mrb[0].mxu0 %v979
      %v1270 = vpop.f32.mrb[0].mxu0
      %v1271 = vadd.f32 %v924, %v1270
      %v1272 = vpop.f32.mrb[0].mxu0
      %1273 = vmatprep.mubr.f32.mxu0 0.0
      %1274 = vmatmul.mubr.f32.gmra.mrb[0].mxu0 %v982
      %v1275 = vpop.f32.mrb[0].mxu0
      %v1276 = vadd.f32 %v924, %v1275
      %v1277 = vpop.f32.mrb[0].mxu0
      %1278 = vmatprep.mubr.f32.mxu0 0.0
      %1279 = vmatmul.mubr.f32.gmra.mrb[0].mxu0 %v985
      %v1280 = vpop.f32.mrb[0].mxu0
      %v1281 = vadd.f32 %v924, %v1280
      %v1282 = vpop.f32.mrb[0].mxu0
      %1283 = vmatprep.mubr.f32.mxu0 0.0
      %1284 = vmatmul.mubr.f32.gmra.mrb[0].mxu0 %v988
      %v1285 = vpop.f32.mrb[0].mxu0
      %v1286 = vadd.f32 %v924, %v1285
      %v1287 = vpop.f32.mrb[0].mxu0
      %1288 = vmatprep.mubr.f32.mxu0 0.0
      %1289 = vmatmul.mubr.f32.gmra.mrb[0].mxu0 %v991
      %v1290 = vpop.f32.mrb[0].mxu0
      %v1291 = vadd.f32 %v924, %v1290
      %v1292 = vpop.f32.mrb[0].mxu0
      %1293 = vmatprep.mubr.f32.mxu0 0.0
      %1294 = vmatmul.mubr.f32.gmra.mrb[0].mxu0 %v994
      %v1295 = vpop.f32.mrb[0].mxu0
      %v1296 = vadd.f32 %v924, %v1295
      %v1297 = vpop.f32.mrb[0].mxu0
      %1298 = vmatprep.mubr.f32.mxu0 0.0
      %1299 = vmatmul.mubr.f32.gmra.mrb[0].mxu0 %v997
      %v1300 = vpop.f32.mrb[0].mxu0
      %v1301 = vadd.f32 %v924, %v1300
      %v1302 = vpop.f32.mrb[0].mxu0
      %1303 = vmatprep.mubr.f32.mxu0 0.0
      %1304 = vmatmul.mubr.f32.gmra.mrb[0].mxu0 %v1000
      %v1305 = vpop.f32.mrb[0].mxu0
      %v1306 = vadd.f32 %v924, %v1305
      %v1307 = vpop.f32.mrb[0].mxu0
      %1308 = vmatprep.mubr.f32.mxu0 0.0
      %1309 = vmatmul.mubr.f32.gmra.mrb[0].mxu0 %v1003
      %v1310 = vpop.f32.mrb[0].mxu0
      %v1311 = vadd.f32 %v924, %v1310
      %v1312 = vpop.f32.mrb[0].mxu0
      %1313 = vmatprep.mubr.f32.mxu0 0.0
      %1314 = vmatmul.mubr.f32.gmra.mrb[0].mxu0 %v1006
      %v1315 = vpop.f32.mrb[0].mxu0
      %v1316 = vadd.f32 %v924, %v1315
      %v1317 = vpop.f32.mrb[0].mxu0
      %1318 = vmatprep.mubr.f32.mxu0 0.0
      %1319 = vmatmul.mubr.f32.gmra.mrb[0].mxu0 %v1009
      %v1320 = vpop.f32.mrb[0].mxu0
      %v1321 = vadd.f32 %v924, %v1320
      %v1322 = vpop.f32.mrb[0].mxu0
      %1323 = vmatprep.mubr.f32.mxu0 0.0
      %1324 = vmatmul.mubr.f32.gmra.mrb[0].mxu0 %v1012
      %v1325 = vpop.f32.mrb[0].mxu0
      %v1326 = vadd.f32 %v924, %v1325
      %v1327 = vpop.f32.mrb[0].mxu0
      %1328 = vmatprep.mubr.f32.mxu0 0.0
      %1329 = vmatmul.mubr.f32.gmra.mrb[0].mxu0 %v1015
      %v1330 = vpop.f32.mrb[0].mxu0
      %v1331 = vadd.f32 %v924, %v1330
      %v1332 = vpop.f32.mrb[0].mxu0
      %1333 = vmatprep.mubr.f32.mxu0 0.0
      %1334 = vmatmul.mubr.f32.gmra.mrb[0].mxu0 %v1018
      %v1335 = vpop.f32.mrb[0].mxu0
      %v1336 = vadd.f32 %v924, %v1335
      %v1337 = vpop.f32.mrb[0].mxu0
      %1338 = vmatprep.mubr.f32.mxu0 0.0
      %1339 = vmatmul.mubr.f32.gmra.mrb[0].mxu0 %v1021
      %v1340 = vpop.f32.mrb[0].mxu0
      %v1341 = vadd.f32 %v924, %v1340
      %v1342 = vpop.f32.mrb[0].mxu0
      %1343 = vmatprep.mubr.f32.mxu0 0.0
      %1344 = vmatmul.mubr.f32.gmra.mrb[0].mxu0 %v1024
      %v1345 = vpop.f32.mrb[0].mxu0
      %v1346 = vadd.f32 %v924, %v1345
      %v1347 = vpop.f32.mrb[0].mxu0
      %1348 = vmatprep.mubr.f32.mxu0 0.0
      %1349 = vmatmul.mubr.f32.gmra.mrb[0].mxu0 %v1027
      %v1350 = vpop.f32.mrb[0].mxu0
      %v1351 = vadd.f32 %v924, %v1350
      %v1352 = vpop.f32.mrb[0].mxu0
      %1353 = vmatprep.mubr.f32.mxu0 0.0
      %1354 = vmatmul.mubr.f32.gmra.mrb[0].mxu0 %v1030
      %v1355 = vpop.f32.mrb[0].mxu0
      %v1356 = vadd.f32 %v924, %v1355
      %v1357 = vpop.f32.mrb[0].mxu0
      %1358 = vmatprep.mubr.f32.mxu0 0.0
      %1359 = vmatmul.mubr.f32.gmra.mrb[0].mxu0 %v1033
      %v1360 = vpop.f32.mrb[0].mxu0
      %v1361 = vadd.f32 %v924, %v1360
      %v1362 = vpop.f32.mrb[0].mxu0
      %1363 = vmatprep.mubr.f32.mxu0 0.0
      %1364 = vmatmul.mubr.f32.gmra.mrb[0].mxu0 %v1036
      %v1365 = vpop.f32.mrb[0].mxu0
      %v1366 = vadd.f32 %v924, %v1365
      %v1367 = vpop.f32.mrb[0].mxu0
      %1368 = vmatprep.mubr.f32.mxu0 0.0
      %1369 = vmatmul.mubr.f32.gmra.mrb[0].mxu0 %v1039
      %v1370 = vpop.f32.mrb[0].mxu0
      %v1371 = vadd.f32 %v924, %v1370
      %v1372 = vpop.f32.mrb[0].mxu0
      %1373 = vmatprep.mubr.f32.mxu0 0.0
      %1374 = vmatmul.mubr.f32.gmra.mrb[0].mxu0 %v1042
      %v1375 = vpop.f32.mrb[0].mxu0
      %v1376 = vadd.f32 %v924, %v1375
      %v1377 = vpop.f32.mrb[0].mxu0
      %1378 = vmatprep.mubr.f32.mxu0 0.0
      %1379 = vmatmul.mubr.f32.gmra.mrb[0].mxu0 %v1045
      %v1380 = vpop.f32.mrb[0].mxu0
      %v1381 = vadd.f32 %v924, %v1380
      %v1382 = vpop.f32.mrb[0].mxu0
      %1383 = vmatprep.mubr.f32.mxu0 0.0
      %1384 = vmatmul.mubr.f32.gmra.mrb[0].mxu0 %v1048
      %v1385 = vpop.f32.mrb[0].mxu0
      %v1386 = vadd.f32 %v924, %v1385
      %v1387 = vpop.f32.mrb[0].mxu0
      %1388 = vmatprep.mubr.f32.mxu0 0.0
      %1389 = vmatmul.mubr.f32.gmra.mrb[0].mxu0 %v1051
      %v1390 = vpop.f32.mrb[0].mxu0
      %v1391 = vadd.f32 %v924, %v1390
      %v1392 = vpop.f32.mrb[0].mxu0
      %1393 = vmatprep.mubr.f32.mxu0 0.0
      %1394 = vmatmul.mubr.f32.gmra.mrb[0].mxu0 %v1054
      %v1395 = vpop.f32.mrb[0].mxu0
      %v1396 = vadd.f32 %v924, %v1395
      %v1397 = vpop.f32.mrb[0].mxu0
      %1398 = vmatprep.mubr.f32.mxu0 0.0
      %1399 = vmatmul.mubr.f32.gmra.mrb[0].mxu0 %v1057
      %v1400 = vpop.f32.mrb[0].mxu0
      %v1401 = vadd.f32 %v924, %v1400
      %v1402 = vpop.f32.mrb[0].mxu0
      %1403 = vmatprep.mubr.f32.mxu0 0.0
      %1404 = vmatmul.mubr.f32.gmra.mrb[0].mxu0 %v1060
      %v1405 = vpop.f32.mrb[0].mxu0
      %v1406 = vadd.f32 %v924, %v1405
      %v1407 = vpop.f32.mrb[0].mxu0
      %1408 = vmatprep.mubr.f32.mxu0 0.0
      %1409 = vmatmul.mubr.f32.gmra.mrb[0].mxu0 %v1063
      %v1410 = vpop.f32.mrb[0].mxu0
      %v1411 = vadd.f32 %v924, %v1410
      %v1412 = vpop.f32.mrb[0].mxu0
      %1413 = vmatprep.mubr.f32.mxu0 0.0
      %1414 = vmatmul.mubr.f32.gmra.mrb[0].mxu0 %v1066
      %v1415 = vpop.f32.mrb[0].mxu0
      %v1416 = vadd.f32 %v924, %v1415
      %v1417 = vpop.f32.mrb[0].mxu0
      %1418 = vmatprep.mubr.f32.mxu0 0.0
      %1419 = vmatmul.mubr.f32.gmra.mrb[0].mxu0 %v1069
      %v1420 = vpop.f32.mrb[0].mxu0
      %v1421 = vadd.f32 %v924, %v1420
      %v1422 = vpop.f32.mrb[0].mxu0
      %1423 = vmatprep.mubr.f32.mxu0 0.0
      %1424 = vmatmul.mubr.f32.gmra.mrb[0].mxu0 %v1072
      %v1425 = vpop.f32.mrb[0].mxu0
      %v1426 = vadd.f32 %v924, %v1425
      %v1427 = vpop.f32.mrb[0].mxu0
      %1428 = vmatprep.mubr.f32.mxu0 0.0
      %1429 = vmatmul.mubr.f32.gmra.mrb[0].mxu0 %v1075
      %v1430 = vpop.f32.mrb[0].mxu0
      %v1431 = vadd.f32 %v924, %v1430
      %v1432 = vpop.f32.mrb[0].mxu0
      %1433 = vmatprep.mubr.f32.mxu0 0.0
      %1434 = vmatmul.mubr.f32.gmra.mrb[0].mxu0 %v1078
      %v1435 = vpop.f32.mrb[0].mxu0
      %v1436 = vadd.f32 %v924, %v1435
      %v1437 = vpop.f32.mrb[0].mxu0
      %1438 = vmatprep.mubr.f32.mxu0 0.0
      %1439 = vmatmul.mubr.f32.gmra.mrb[0].mxu0 %v1081
      %v1440 = vpop.f32.mrb[0].mxu0
      %v1441 = vadd.f32 %v924, %v1440
      %v1442 = vpop.f32.mrb[0].mxu0
      %1443 = vmatprep.mubr.f32.mxu0 0.0
      %1444 = vmatmul.mubr.f32.gmra.mrb[0].mxu0 %v1084
      %v1445 = vpop.f32.mrb[0].mxu0
      %v1446 = vadd.f32 %v924, %v1445
      %v1447 = vpop.f32.mrb[0].mxu0
      %1448 = vmatprep.mubr.f32.mxu0 0.0
      %1449 = vmatmul.mubr.f32.gmra.mrb[0].mxu0 %v1087
      %v1450 = vpop.f32.mrb[0].mxu0
      %v1451 = vadd.f32 %v924, %v1450
      %v1452 = vpop.f32.mrb[0].mxu0
      %1453 = vmatprep.mubr.f32.mxu0 0.0
      %1454 = vmatmul.mubr.f32.gmra.mrb[0].mxu0 %v1090
      %v1455 = vpop.f32.mrb[0].mxu0
      %v1456 = vadd.f32 %v924, %v1455
      %v1457 = vpop.f32.mrb[0].mxu0
      %1458 = vmatprep.mubr.f32.mxu0 0.0
      %1459 = vmatmul.mubr.f32.gmra.mrb[0].mxu0 %v1093
      %v1460 = vpop.f32.mrb[0].mxu0
      %v1461 = vadd.f32 %v924, %v1460
      %v1462 = vpop.f32.mrb[0].mxu0
      %1463 = vmatprep.mubr.f32.mxu0 0.0
      %1464 = vmatmul.mubr.f32.gmra.mrb[0].mxu0 %v1096
      %v1465 = vpop.f32.mrb[0].mxu0
      %v1466 = vadd.f32 %v924, %v1465
      %v1467 = vpop.f32.mrb[0].mxu0
      %1468 = vmatprep.mubr.f32.mxu0 0.0
      %1469 = vmatmul.mubr.f32.gmra.mrb[0].mxu0 %v1099
      %v1470 = vpop.f32.mrb[0].mxu0
      %v1471 = vadd.f32 %v924, %v1470
      %v1472 = vpop.f32.mrb[0].mxu0
      %1473 = vmatprep.mubr.f32.mxu0 0.0
      %1474 = vmatmul.mubr.f32.gmra.mrb[0].mxu0 %v1102
      %v1475 = vpop.f32.mrb[0].mxu0
      %v1476 = vadd.f32 %v924, %v1475
      %v1477 = vpop.f32.mrb[0].mxu0
      %1478 = vmatprep.mubr.f32.mxu0 0.0
      %1479 = vmatmul.mubr.f32.gmra.mrb[0].mxu0 %v1105
      %v1480 = vpop.f32.mrb[0].mxu0
      %v1481 = vadd.f32 %v924, %v1480
      %v1482 = vpop.f32.mrb[0].mxu0
      %1483 = vmatprep.mubr.f32.mxu0 0.0
      %1484 = vmatmul.mubr.f32.gmra.mrb[0].mxu0 %v1108
      %v1485 = vpop.f32.mrb[0].mxu0
      %v1486 = vadd.f32 %v924, %v1485
      %v1487 = vpop.f32.mrb[0].mxu0
      %1488 = vmatprep.mubr.f32.mxu0 0.0
      %1489 = vmatmul.mubr.f32.gmra.mrb[0].mxu0 %v1111
      %v1490 = vpop.f32.mrb[0].mxu0
      %v1491 = vadd.f32 %v924, %v1490
      %v1492 = vpop.f32.mrb[0].mxu0
      %1493 = vmatprep.mubr.f32.mxu0 0.0
      %1494 = vmatmul.mubr.f32.gmra.mrb[0].mxu0 %v1114
      %v1495 = vpop.f32.mrb[0].mxu0
      %v1496 = vadd.f32 %v924, %v1495
      %v1497 = vpop.f32.mrb[0].mxu0
      %1498 = vmatprep.mubr.f32.mxu0 0.0
      %1499 = vmatmul.mubr.f32.gmra.mrb[0].mxu0 %v1117
      %v1500 = vpop.f32.mrb[0].mxu0
      %v1501 = vadd.f32 %v924, %v1500
      %v1502 = vpop.f32.mrb[0].mxu0
      %1503 = vdwg.mxu0
      %1504 = vst [vmem:[%s226] sm:$0xff] %v1186
      %1505 = vst [vmem:[%s226 + $0x8] sm:$0xff] %v1191
      %1506 = vst [vmem:[%s226 + $0x10] sm:$0xff] %v1196
      %1507 = vst [vmem:[%s226 + $0x18] sm:$0xff] %v1201
      %1508 = vst [vmem:[%s226 + $0x20] sm:$0xff] %v1206
      %1509 = vst [vmem:[%s226 + $0x28] sm:$0xff] %v1211
      %1510 = vst [vmem:[%s226 + $0x30] sm:$0xff] %v1216
      %1511 = vst [vmem:[%s226 + $0x38] sm:$0xff] %v1221
      %1512 = vst [vmem:[%s226 + $0x40] sm:$0xff] %v1226
      %1513 = vst [vmem:[%s226 + $0x48] sm:$0xff] %v1231
      %1514 = vst [vmem:[%s226 + $0x50] sm:$0xff] %v1236
      %1515 = vst [vmem:[%s226 + $0x58] sm:$0xff] %v1241
      %1516 = vst [vmem:[%s226 + $0x60] sm:$0xff] %v1246
      %1517 = vst [vmem:[%s226 + $0x68] sm:$0xff] %v1251
      %1518 = vst [vmem:[%s226 + $0x70] sm:$0xff] %v1256
      %1519 = vst [vmem:[%s226 + $0x78] sm:$0xff] %v1261
      %1520 = vst [vmem:[%s226 + $0x80] sm:$0xff] %v1266
      %1521 = vst [vmem:[%s226 + $0x88] sm:$0xff] %v1271
      %1522 = vst [vmem:[%s226 + $0x90] sm:$0xff] %v1276
      %1523 = vst [vmem:[%s226 + $0x98] sm:$0xff] %v1281
      %1524 = vst [vmem:[%s226 + $0xa0] sm:$0xff] %v1286
      %1525 = vst [vmem:[%s226 + $0xa8] sm:$0xff] %v1291
      %1526 = vst [vmem:[%s226 + $0xb0] sm:$0xff] %v1296
      %1527 = vst [vmem:[%s226 + $0xb8] sm:$0xff] %v1301
      %1528 = vst [vmem:[%s226 + $0xc0] sm:$0xff] %v1306
      %1529 = vst [vmem:[%s226 + $0xc8] sm:$0xff] %v1311
      %1530 = vst [vmem:[%s226 + $0xd0] sm:$0xff] %v1316
      %1531 = vst [vmem:[%s226 + $0xd8] sm:$0xff] %v1321
      %1532 = vst [vmem:[%s226 + $0xe0] sm:$0xff] %v1326
      %1533 = vst [vmem:[%s226 + $0xe8] sm:$0xff] %v1331
      %1534 = vst [vmem:[%s226 + $0xf0] sm:$0xff] %v1336
      %1535 = vst [vmem:[%s226 + $0xf8] sm:$0xff] %v1341
      %1536 = vst [vmem:[%s226 + $0x100] sm:$0xff] %v1346
      %1537 = vst [vmem:[%s226 + $0x108] sm:$0xff] %v1351
      %1538 = vst [vmem:[%s226 + $0x110] sm:$0xff] %v1356
      %1539 = vst [vmem:[%s226 + $0x118] sm:$0xff] %v1361
      %1540 = vst [vmem:[%s226 + $0x120] sm:$0xff] %v1366
      %1541 = vst [vmem:[%s226 + $0x128] sm:$0xff] %v1371
      %1542 = vst [vmem:[%s226 + $0x130] sm:$0xff] %v1376
      %1543 = vst [vmem:[%s226 + $0x138] sm:$0xff] %v1381
      %1544 = vst [vmem:[%s226 + $0x140] sm:$0xff] %v1386
      %1545 = vst [vmem:[%s226 + $0x148] sm:$0xff] %v1391
      %1546 = vst [vmem:[%s226 + $0x150] sm:$0xff] %v1396
      %1547 = vst [vmem:[%s226 + $0x158] sm:$0xff] %v1401
      %1548 = vst [vmem:[%s226 + $0x160] sm:$0xff] %v1406
      %1549 = vst [vmem:[%s226 + $0x168] sm:$0xff] %v1411
      %1550 = vst [vmem:[%s226 + $0x170] sm:$0xff] %v1416
      %1551 = vst [vmem:[%s226 + $0x178] sm:$0xff] %v1421
      %1552 = vst [vmem:[%s226 + $0x180] sm:$0xff] %v1426
      %1553 = vst [vmem:[%s226 + $0x188] sm:$0xff] %v1431
      %1554 = vst [vmem:[%s226 + $0x190] sm:$0xff] %v1436
      %1555 = vst [vmem:[%s226 + $0x198] sm:$0xff] %v1441
      %1556 = vst [vmem:[%s226 + $0x1a0] sm:$0xff] %v1446
      %1557 = vst [vmem:[%s226 + $0x1a8] sm:$0xff] %v1451
      %1558 = vst [vmem:[%s226 + $0x1b0] sm:$0xff] %v1456
      %1559 = vst [vmem:[%s226 + $0x1b8] sm:$0xff] %v1461
      %1560 = vst [vmem:[%s226 + $0x1c0] sm:$0xff] %v1466
      %1561 = vst [vmem:[%s226 + $0x1c8] sm:$0xff] %v1471
      %1562 = vst [vmem:[%s226 + $0x1d0] sm:$0xff] %v1476
      %1563 = vst [vmem:[%s226 + $0x1d8] sm:$0xff] %v1481
      %1564 = vst [vmem:[%s226 + $0x1e0] sm:$0xff] %v1486
      %1565 = vst [vmem:[%s226 + $0x1e8] sm:$0xff] %v1491
      %1566 = vst [vmem:[%s226 + $0x1f0] sm:$0xff] %v1496
      %1567 = vst [vmem:[%s226 + $0x1f8] sm:$0xff] %v1501
      %s1568 = smul.u32 64, %s16
      %p1569 = scmp.lt.s32.totalorder %s1568, 127
      %s1570 = scalar_select %p1569, %s1568, 127
      %s1571 = smul.addr %s1570, 8
      %s1572 = scalar_lea.vmem %s5, %s1571
      // Predicated region
      $region41: #{net_forward.1} parent=39 // pred_check
        %p1573 = pneg %p144
      $region42: #{net_forward.1} parent=39 // pred_check_branch
        %1575 = sbr.rel (%p1573) target = $region44
      $region43: #{net_forward.1} parent=39 // pred_region
        %s1576 = smul.u32 64, %s16
      $region44: #{net_forward.1} parent=39 // pred_fallthru
        _
    $region40: #{net_forward.1} parent=5 // pred_fallthru
      _
    %p1577 = scmp.le.s32.totalorder 2, %s11
    // Predicated region
    $region45: #{net_forward.1} parent=5 // pred_check
      %p1578 = pneg %p1577
    $region46: #{net_forward.1} parent=5 // pred_check_branch
      %1580 = sbr.rel (%p1578) target = $region48
    $region47: #{net_forward.1} parent=5 // pred_region
      %s1581 = ssub.s32 %s11, 2
      // Predicated region
      $region49: #{net_forward.1} parent=47 // pred_check
        %p1582 = pneg %p150
      $region50: #{net_forward.1} parent=47 // pred_check_branch
        %1584 = sbr.rel (%p1582) target = $region52
      $region51: #{net_forward.1} parent=47 // pred_region
        %s1585 = smul.u32 64, %s17
        %p1586 = scmp.lt.s32.totalorder %s1585, 127
        %s1587 = scalar_select %p1586, %s1585, 127
        %s1588 = smul.addr %s1587, 8
        %s1589 = scalar_lea.vmem %s5, %s1588
      $region52: #{net_forward.1} parent=47 // pred_fallthru
        _
    $region48: #{net_forward.1} parent=5 // pred_fallthru
      _
  $region6: #{net_forward.1} parent=0 // loop_footer
    %s15 = sadd.s32 1, %s11
  $region7: #{net_forward.1} parent=0 // loop_footer_branch
    %10 = sbr.rel target = $region3
  $region8: #{net_forward.1} parent=0 // loop_exit
    _

</llo_original>
